<compile_context>
chip_gen: v6e
topology: v6e:2x2x1
jax: 0.10.0
libtpu: 0.0.40
codegen_flags: <defaults>
</compile_context>

<pallas_src>
import functools

import jax
import jax.numpy as jnp
from jax.experimental import pallas as pl
from jax.experimental.pallas import tpu as pltpu


def _pe_fourier_kernel(x_ref, wt_ref, o_ref, *, dim_in, raw_coords, use_mxu):
    x = x_ref[...]                                   # (TM, dim_in)  f32
    w_t = wt_ref[...]                                # (dim_in, dim_fourier) f32

    if use_mxu:
        z = jnp.dot(x, w_t, preferred_element_type=jnp.float32)
    else:
        # dim_in is tiny (e.g. 3): unrolled VPU broadcast multiply-adds are
        # cheaper than pushing a (TM,3)x(3,F) tile through the MXU.
        z = x[:, 0:1] * w_t[0:1, :]
        for k in range(1, dim_in):
            z = z + x[:, k : k + 1] * w_t[k : k + 1, :]

    ff = jnp.sin(z)                                  # (TM, dim_fourier)

    if raw_coords:
        out = jnp.concatenate([x.astype(jnp.float32), ff], axis=-1)
    else:
        out = ff
    # single full-block store
    o_ref[...] = out.astype(o_ref.dtype)


def positional_encoding_fourier(points, weight, *, dim_out, raw_coords, tm=4096):
    """points: (..., dim_in) float32; weight: (dim_fourier, dim_in) (PyTorch layout)."""
    dim_in = points.shape[-1]
    dim_fourier = weight.shape[0]
    assert dim_fourier == (dim_out - dim_in if raw_coords else dim_out)

    lead_shape = points.shape[:-1]
    x = points.reshape(-1, dim_in)
    n = x.shape[0]

    # One-time wrapper-side transpose: kernel does x @ w_t with no per-step XLU work.
    w_t = weight.T  # (dim_in, dim_fourier)

    # Row tile: multiple of 8 (sublane alignment), capped so a tiny input does
    # not allocate a huge block. For big N, keep tm large (1K-8K sweet spot);
    # raise further per-generation only after checking the scoped VMEM limit
    # (v5e default 16 MiB; v7x physical VMEM is 64 MiB).
    tm_eff = max(8, min(tm, ((n + 7) // 8) * 8))
    grid = (pl.cdiv(n, tm_eff),)

    use_mxu = dim_in >= 16

    kernel = functools.partial(
        _pe_fourier_kernel, dim_in=dim_in, raw_coords=raw_coords, use_mxu=use_mxu
    )

    out = pl.pallas_call(
        kernel,
        out_shape=jax.ShapeDtypeStruct((n, dim_out), points.dtype),
        grid=grid,
        in_specs=[
            pl.BlockSpec((tm_eff, dim_in), lambda i: (i, 0)),
            pl.BlockSpec((dim_in, dim_fourier), lambda i: (0, 0)),  # resident weight
        ],
        out_specs=pl.BlockSpec((tm_eff, dim_out), lambda i: (i, 0)),
        compiler_params=pltpu.CompilerParams(
            dimension_semantics=("parallel",)  # row blocks independent -> megacore-shardable
        ),
    )(x, w_t)

    return out.reshape(*lead_shape, dim_out)


def _reference(points, weight, *, raw_coords):
    ff = jnp.sin(points @ weight.T)
    return jnp.concatenate([points, ff], axis=-1) if raw_coords else ff


if __name__ == "__main__":
    key = jax.random.PRNGKey(0)
    k_pts, k_w1, k_w2 = jax.random.split(key, 3)

    dim_in = 3
    dim_out = 32
    mu, sigma = 0.0, 2.0

    # points: (batch=2, seq=8, dim_in=3)
    points = jax.random.uniform(k_pts, (2, 8, dim_in), dtype=jnp.float32)

    # --- raw_coords=True: Fourier dim = dim_out - dim_in ---
    w_raw = mu + sigma * jax.random.normal(
        k_w1, (dim_out - dim_in, dim_in), dtype=jnp.float32
    )
    out_raw = positional_encoding_fourier(
        points, w_raw, dim_out=dim_out, raw_coords=True
    )
    jax.block_until_ready(out_raw)
    ref_raw = _reference(points, w_raw, raw_coords=True)
    assert out_raw.shape == (2, 8, dim_out)
    assert jnp.allclose(out_raw, ref_raw, atol=1e-5, rtol=1e-5)

    # --- raw_coords=False: Fourier dim = dim_out ---
    w_full = mu + sigma * jax.random.normal(
        k_w2, (dim_out, dim_in), dtype=jnp.float32
    )
    out_full = positional_encoding_fourier(
        points, w_full, dim_out=dim_out, raw_coords=False
    )
    jax.block_until_ready(out_full)
    ref_full = _reference(points, w_full, raw_coords=False)
    assert out_full.shape == (2, 8, dim_out)
    assert jnp.allclose(out_full, ref_full, atol=1e-5, rtol=1e-5)

    print("KERNEL_OK")
</pallas_src>

<mosaic_0001>
module attributes {stable_mosaic.version = 11 : i64} {
  func.func @_pe_fourier_kernel(%arg0: i32, %arg1: memref<16x3xf32, #tpu.memory_space<vmem>>, %arg2: memref<3x29xf32, #tpu.memory_space<vmem>>, %arg3: memref<16x32xf32, #tpu.memory_space<vmem>>) attributes {dimension_semantics = [#tpu.dimension_semantics<parallel>], iteration_bounds = array<i64: 1>, scalar_prefetch = 0 : i64, scratch_operands = 0 : i64, tpu.core_type = #tpu.core_type<tc>, window_params = [{transform_indices = @transform_0, window_bounds = array<i64: 16, 3>}, {pipeline_mode = #tpu.pipeline_mode<synchronous>, transform_indices = @transform_1, window_bounds = array<i64: 3, 29>}, {transform_indices = @transform_2, window_bounds = array<i64: 16, 32>}]} {
    %c0 = arith.constant 0 : index
    %c0_0 = arith.constant 0 : index
    %0 = vector.load %arg1[%c0, %c0_0] : memref<16x3xf32, #tpu.memory_space<vmem>>, vector<16x3xf32>
    %c0_1 = arith.constant 0 : index
    %c0_2 = arith.constant 0 : index
    %1 = vector.load %arg2[%c0_1, %c0_2] : memref<3x29xf32, #tpu.memory_space<vmem>>, vector<3x29xf32>
    %2 = vector.extract_strided_slice %0 {offsets = [0, 0], sizes = [16, 1], strides = [1, 1]} : vector<16x3xf32> to vector<16x1xf32>
    %3 = vector.extract_strided_slice %1 {offsets = [0, 0], sizes = [1, 29], strides = [1, 1]} : vector<3x29xf32> to vector<1x29xf32>
    %4 = vector.broadcast %2 : vector<16x1xf32> to vector<16x29xf32>
    %5 = vector.broadcast %3 : vector<1x29xf32> to vector<16x29xf32>
    %6 = arith.mulf %4, %5 : vector<16x29xf32>
    %7 = vector.extract_strided_slice %0 {offsets = [0, 1], sizes = [16, 1], strides = [1, 1]} : vector<16x3xf32> to vector<16x1xf32>
    %8 = vector.extract_strided_slice %1 {offsets = [1, 0], sizes = [1, 29], strides = [1, 1]} : vector<3x29xf32> to vector<1x29xf32>
    %9 = vector.broadcast %7 : vector<16x1xf32> to vector<16x29xf32>
    %10 = vector.broadcast %8 : vector<1x29xf32> to vector<16x29xf32>
    %11 = arith.mulf %9, %10 : vector<16x29xf32>
    %12 = arith.addf %6, %11 : vector<16x29xf32>
    %13 = vector.extract_strided_slice %0 {offsets = [0, 2], sizes = [16, 1], strides = [1, 1]} : vector<16x3xf32> to vector<16x1xf32>
    %14 = vector.extract_strided_slice %1 {offsets = [2, 0], sizes = [1, 29], strides = [1, 1]} : vector<3x29xf32> to vector<1x29xf32>
    %15 = vector.broadcast %13 : vector<16x1xf32> to vector<16x29xf32>
    %16 = vector.broadcast %14 : vector<1x29xf32> to vector<16x29xf32>
    %17 = arith.mulf %15, %16 : vector<16x29xf32>
    %18 = arith.addf %12, %17 : vector<16x29xf32>
    %19 = math.sin %18 : vector<16x29xf32>
    %20 = tpu.concatenate %0, %19 in 1 : vector<16x3xf32>, vector<16x29xf32> -> vector<16x32xf32>
    %c0_3 = arith.constant 0 : index
    %c0_4 = arith.constant 0 : index
    %21 = vector.load %arg3[%c0_3, %c0_4] : memref<16x32xf32, #tpu.memory_space<vmem>>, vector<16x32xf32>
    tpu.vector_store %arg3[%c0_3, %c0_4], %20 {strides = array<i32>} : memref<16x32xf32, #tpu.memory_space<vmem>>, vector<16x32xf32>,
    return
  }
  func.func @transform_0(%arg0: i32) -> (i32, i32) {
    %c0_i32 = arith.constant 0 : i32
    %c0_i32_0 = arith.constant 0 : i32
    return %arg0, %c0_i32 : i32, i32
  }
  func.func @transform_1(%arg0: i32) -> (i32, i32) {
    %c0_i32 = arith.constant 0 : i32
    %c0_i32_0 = arith.constant 0 : i32
    %c0_i32_1 = arith.constant 0 : i32
    return %c0_i32, %c0_i32_0 : i32, i32
  }
  func.func @transform_2(%arg0: i32) -> (i32, i32) {
    %c0_i32 = arith.constant 0 : i32
    %c0_i32_0 = arith.constant 0 : i32
    return %arg0, %c0_i32 : i32, i32
  }
}

</mosaic_0001>

<llo_original>
// kernel: tpu_custom_call.1
$region0: #{tpu_custom_call.1}
  #allocation0 [shape = 'u32[]', space=smem, size = 0x4, offset = 0x4, fixed_abs, tag = 'smem constant byte address 0x4 - core index']
  #allocation1 [shape = 'u32[144,128]{1,0:T(1,128)}', space=vmem, size = 0x12000, scoped, tag = 'internal scratch']
  %s0 = inlined_call_operand.vmem [shape: f32[16,3], index: 0, kind: input, shape index: {}]
  %s1 = inlined_call_operand.vmem [shape: f32[3,29], index: 1, kind: input, shape index: {}]
  %s2 = inlined_call_operand.hbm [shape: f32[16,32], index: 2, kind: output, shape index: {}]
  %s3 = sld [smem:[#allocation0]]
  $region18: #{tpu_custom_call.1} parent=0
    _
  %s5 = ssub.s32 1, %s3
  %s6 = scalar_select 0, %s5, %s3
  $region1: #{tpu_custom_call.1} parent=0
    #allocation2 [shape = 'u8[8192]{0}', space=vmem, size = 0x2000, scoped, tag = 'output window, operand 0, single buffered']
    #allocation3 [shape = 's32[1]{0}', space=sflag, size = 0x4, scoped, tag = 'scoped memory for tpu_custom_call.1']
    %7 = vsyncpa [#allocation3], 0
    // Predicated region
    $region2: #{tpu_custom_call.1} parent=1 // pred_check
      _
    $region3: #{tpu_custom_call.1} parent=1 // pred_check_branch
      %9 = sbr.rel (0) target = $region5
    $region4: #{tpu_custom_call.1} parent=1 // pred_region
      _
    $region5: #{tpu_custom_call.1} parent=1 // pred_fallthru
      _
    // Predicated region
    $region6: #{tpu_custom_call.1} parent=1 // pred_check
      _
    $region7: #{tpu_custom_call.1} parent=1 // pred_check_branch
      %11 = sbr.rel (0) target = $region9
    $region8: #{tpu_custom_call.1} parent=1 // pred_region
      _
    $region9: #{tpu_custom_call.1} parent=1 // pred_fallthru
      _
    %v12 = vld [vmem:[%s0] sm:$0xff]
    %v13 = vld [vmem:[%s0 + $0x8] sm:$0xff]
    %v14 = vld [vmem:[%s1] sm:$0x7]
    %16 = vset.pattern.permute.xlu0 0
    %17 = vperm.xlu0 %16, %v12
    %v18 = vpop.permute.xlu0 %17
    %21 = vset.pattern.permute.xlu0 0
    %22 = vperm.xlu0 %21, %v13
    %v23 = vpop.permute.xlu0 %22
    %v25 = vlaneseq
    %v26 = vshrl.u32 %v25, 7
    %v27 = vsub.s32 0, %v26
    %v28 = vrot.slane %v14, %v27
    %v29 = vmul.f32 %v18, %v28
    %v30 = vmul.f32 %v23, %v28
    %31 = vset.pattern.permute.xlu0 1
    %32 = vperm.xlu0 %31, %v12
    %v33 = vpop.permute.xlu0 %32
    %35 = vset.pattern.permute.xlu0 1
    %36 = vperm.xlu0 %35, %v13
    %v37 = vpop.permute.xlu0 %36
    %v39 = vlaneseq
    %v40 = vshrl.u32 %v39, 7
    %v41 = vsub.s32 1, %v40
    %v42 = vrot.slane %v14, %v41
    %v43 = vmul.f32 %v33, %v42
    %v44 = vmul.f32 %v37, %v42
    %v45 = vadd.f32 %v29, %v43
    %v46 = vadd.f32 %v30, %v44
    %47 = vset.pattern.permute.xlu0 2
    %48 = vperm.xlu0 %47, %v12
    %v49 = vpop.permute.xlu0 %48
    %51 = vset.pattern.permute.xlu0 2
    %52 = vperm.xlu0 %51, %v13
    %v53 = vpop.permute.xlu0 %52
    %v55 = vlaneseq
    %v56 = vshrl.u32 %v55, 7
    %v57 = vsub.s32 2, %v56
    %v58 = vrot.slane %v14, %v57
    %v59 = vmul.f32 %v49, %v58
    %v60 = vmul.f32 %v53, %v58
    %v61 = vadd.f32 %v45, %v59
    %v62 = vadd.f32 %v46, %v60
    %v63 = vand.u32 2147483647, %v61
    %vm64 = vcmp.le.f32.partialorder %v63, 0.7853982
    %vm65 = vcmp.lt.s32.totalorder %v61, 0
    %v66 = vand.u32 %v61, 2139095040
    %v67 = vshrl.u32 %v66, 23
    %v68 = vsub.s32 %v67, 127
    %v69 = vand.u32 2147483647, %v61
    %v70 = vand.u32 %v69, 8388607
    %v71 = vor.u32 %v70, 8388608
    %v72 = vsub.s32 0, %v71
    %v73 = vadd.s32 %v68, 1
    %vm74 = vcmp.gt.s32.totalorder %v73, 0
    %v75 = vsel %vm74, %v73, 0
    %v76 = vshrl.u32 %v75, 5
    %v77 = vand.u32 %v75, 31
    %v78 = vsub.s32 32, %v77
    %v79 = vshrl.u32 683565275, %v78
    %v80 = vshll.u32 683565275, %v77
    %v81 = vshrl.u32 2475754826, %v78
    %v82 = vor.u32 %v80, %v81
    %v83 = vshll.u32 2475754826, %v77
    %v84 = vshrl.u32 2131351028, %v78
    %v85 = vor.u32 %v83, %v84
    %v86 = vshll.u32 2131351028, %v77
    %v87 = vshrl.u32 2102212464, %v78
    %v88 = vor.u32 %v86, %v87
    %v89 = vshll.u32 2102212464, %v77
    %v90 = vshrl.u32 920167782, %v78
    %v91 = vor.u32 %v89, %v90
    %v92 = vshll.u32 920167782, %v77
    %v93 = vshrl.u32 1326507024, %v78
    %v94 = vor.u32 %v92, %v93
    %vm95 = vcmp.lt.s32.totalorder %v76, 1
    %vm96 = vcmp.lt.s32.totalorder %v76, 2
    %vm97 = vcmp.lt.s32.totalorder %v76, 3
    %vm98 = vcmp.lt.s32.totalorder %v76, 4
    %v99 = vsel %vm95, %v79, %v82
    %v100 = vsel %vm98, %v88, 2102212464
    %v101 = vsel %vm97, %v85, %v100
    %v102 = vsel %vm96, %v99, %v101
    %v103 = vsel %vm95, %v82, %v85
    %v104 = vsel %vm98, %v91, 920167782
    %v105 = vsel %vm97, %v88, %v104
    %v106 = vsel %vm96, %v103, %v105
    %v107 = vsel %vm95, %v85, %v88
    %v108 = vsel %vm98, %v94, 1326507024
    %v109 = vsel %vm97, %v91, %v108
    %v110 = vsel %vm96, %v107, %v109
    %v111 = vshll.u32 %v71, 8
    %v112 = vmul.u32.u64.compose %v111, %v110
    %v113 = vextract.low.u32 %v112
    %v114 = vextract.high.u32 %v112
    %v115 = vmul.u32.u64.compose %v111, %v106
    %v116 = vextract.low.u32 %v115
    %v117 = vextract.high.u32 %v115
    %v118 = vmul.u32 %v111, %v102
    %v119 = vadd.s32 %v114, %v116
    %vm120 = vc.u32 %v114, %v116
    %v121 = vadd.s32 %v117, 1
    %v122 = vsel %vm120, %v121, %v117
    %v123 = vadd.s32 %v118, %v122
    %v124 = vadd.s32 %v123, 536870912
    %v125 = vshrl.u32 %v124, 30
    %v126 = vshll.u32 %v125, 30
    %v127 = vsub.s32 %v123, %v126
    %vm128 = vcmp.lt.s32.totalorder %v127, 0
    %v129 = vsub.s32 0, %v127
    %v130 = vsel %vm128, %v129, %v127
    %v131 = vclz %v130
    %v132 = vsub.s32 %v131, 2
    %vm133 = vcmp.gt.s32.totalorder 0, %v132
    %v134 = vsel %vm133, 0, %v132
    %v135 = vsub.s32 32, %v134
    %v136 = vshll.u32 %v127, %v134
    %v137 = vshrl.u32 %v119, %v135
    %v138 = vor.u32 %v136, %v137
    %v139 = vsub.s32 4294967266, %v134
    %v140 = vadd.s32 %v139, 127
    %v141 = vshll.u32 %v140, 23
    %v142 = vor.u32 4788187, %v141
    %v143 = vand.u32 2147483647, %v142
    %v145 = vcvt.s32.f32 %v138
    %v146 = vmul.f32 %v145, %v143
    %v147 = vxor.u32 %v146, 2147483648
    %v148 = vsel %vm65, %v147, %v146
    %v149 = vsub.s32 4, %v125
    %v150 = vsel %vm65, %v149, %v125
    %v151 = vsel %vm64, %v61, %v148
    %v152 = vsel %vm64, 0, %v150
    %v153 = vcosq.f32.pop %v151
    %v154 = vsinq.f32.pop %v151
    %vm155 = vweird.f32 %v61
    %v156 = vadd.s32 %v152, 3
    %v157 = vand.u32 %v156, 3
    %vm158 = vcmp.lt.s32.totalorder %v157, 2
    %vm159 = vcmp.eq.s32.totalorder %v157, 0
    %v160 = vxor.u32 %v154, 2147483648
    %v161 = vsel %vm159, %v153, %v160
    %vm162 = vcmp.eq.s32.totalorder %v157, 2
    %v163 = vxor.u32 %v153, 2147483648
    %v164 = vsel %vm162, %v163, %v154
    %v165 = vsel %vm158, %v161, %v164
    %v166 = vsel %vm155, nan, %v165
    %v167 = vand.u32 2147483647, %v62
    %vm168 = vcmp.le.f32.partialorder %v167, 0.7853982
    %vm169 = vcmp.lt.s32.totalorder %v62, 0
    %v170 = vand.u32 %v62, 2139095040
    %v171 = vshrl.u32 %v170, 23
    %v172 = vsub.s32 %v171, 127
    %v173 = vand.u32 2147483647, %v62
    %v174 = vand.u32 %v173, 8388607
    %v175 = vor.u32 %v174, 8388608
    %v176 = vsub.s32 0, %v175
    %v177 = vadd.s32 %v172, 1
    %vm178 = vcmp.gt.s32.totalorder %v177, 0
    %v179 = vsel %vm178, %v177, 0
    %v180 = vshrl.u32 %v179, 5
    %v181 = vand.u32 %v179, 31
    %v182 = vsub.s32 32, %v181
    %v183 = vshrl.u32 683565275, %v182
    %v184 = vshll.u32 683565275, %v181
    %v185 = vshrl.u32 2475754826, %v182
    %v186 = vor.u32 %v184, %v185
    %v187 = vshll.u32 2475754826, %v181
    %v188 = vshrl.u32 2131351028, %v182
    %v189 = vor.u32 %v187, %v188
    %v190 = vshll.u32 2131351028, %v181
    %v191 = vshrl.u32 2102212464, %v182
    %v192 = vor.u32 %v190, %v191
    %v193 = vshll.u32 2102212464, %v181
    %v194 = vshrl.u32 920167782, %v182
    %v195 = vor.u32 %v193, %v194
    %v196 = vshll.u32 920167782, %v181
    %v197 = vshrl.u32 1326507024, %v182
    %v198 = vor.u32 %v196, %v197
    %vm199 = vcmp.lt.s32.totalorder %v180, 1
    %vm200 = vcmp.lt.s32.totalorder %v180, 2
    %vm201 = vcmp.lt.s32.totalorder %v180, 3
    %vm202 = vcmp.lt.s32.totalorder %v180, 4
    %v203 = vsel %vm199, %v183, %v186
    %v204 = vsel %vm202, %v192, 2102212464
    %v205 = vsel %vm201, %v189, %v204
    %v206 = vsel %vm200, %v203, %v205
    %v207 = vsel %vm199, %v186, %v189
    %v208 = vsel %vm202, %v195, 920167782
    %v209 = vsel %vm201, %v192, %v208
    %v210 = vsel %vm200, %v207, %v209
    %v211 = vsel %vm199, %v189, %v192
    %v212 = vsel %vm202, %v198, 1326507024
    %v213 = vsel %vm201, %v195, %v212
    %v214 = vsel %vm200, %v211, %v213
    %v215 = vshll.u32 %v175, 8
    %v216 = vmul.u32.u64.compose %v215, %v214
    %v217 = vextract.low.u32 %v216
    %v218 = vextract.high.u32 %v216
    %v219 = vmul.u32.u64.compose %v215, %v210
    %v220 = vextract.low.u32 %v219
    %v221 = vextract.high.u32 %v219
    %v222 = vmul.u32 %v215, %v206
    %v223 = vadd.s32 %v218, %v220
    %vm224 = vc.u32 %v218, %v220
    %v225 = vadd.s32 %v221, 1
    %v226 = vsel %vm224, %v225, %v221
    %v227 = vadd.s32 %v222, %v226
    %v228 = vadd.s32 %v227, 536870912
    %v229 = vshrl.u32 %v228, 30
    %v230 = vshll.u32 %v229, 30
    %v231 = vsub.s32 %v227, %v230
    %vm232 = vcmp.lt.s32.totalorder %v231, 0
    %v233 = vsub.s32 0, %v231
    %v234 = vsel %vm232, %v233, %v231
    %v235 = vclz %v234
    %v236 = vsub.s32 %v235, 2
    %vm237 = vcmp.gt.s32.totalorder 0, %v236
    %v238 = vsel %vm237, 0, %v236
    %v239 = vsub.s32 32, %v238
    %v240 = vshll.u32 %v231, %v238
    %v241 = vshrl.u32 %v223, %v239
    %v242 = vor.u32 %v240, %v241
    %v243 = vsub.s32 4294967266, %v238
    %v244 = vadd.s32 %v243, 127
    %v245 = vshll.u32 %v244, 23
    %v246 = vor.u32 4788187, %v245
    %v247 = vand.u32 2147483647, %v246
    %v249 = vcvt.s32.f32 %v242
    %v250 = vmul.f32 %v249, %v247
    %v251 = vxor.u32 %v250, 2147483648
    %v252 = vsel %vm169, %v251, %v250
    %v253 = vsub.s32 4, %v229
    %v254 = vsel %vm169, %v253, %v229
    %v255 = vsel %vm168, %v62, %v252
    %v256 = vsel %vm168, 0, %v254
    %v257 = vcosq.f32.pop %v255
    %v258 = vsinq.f32.pop %v255
    %vm259 = vweird.f32 %v62
    %v260 = vadd.s32 %v256, 3
    %v261 = vand.u32 %v260, 3
    %vm262 = vcmp.lt.s32.totalorder %v261, 2
    %vm263 = vcmp.eq.s32.totalorder %v261, 0
    %v264 = vxor.u32 %v258, 2147483648
    %v265 = vsel %vm263, %v257, %v264
    %vm266 = vcmp.eq.s32.totalorder %v261, 2
    %v267 = vxor.u32 %v257, 2147483648
    %v268 = vsel %vm266, %v267, %v258
    %v269 = vsel %vm262, %v265, %v268
    %v270 = vsel %vm259, nan, %v269
    %273 = vrot.lane.b32.xlu0 %v166, 3
    %v274 = vpop.permute.xlu0 %273
    %275 = vrot.lane.b32.xlu0 %v270, 3
    %v276 = vpop.permute.xlu0 %275
    %vm279 = vcmask 23552
    %v280 = vsel %vm279, %v12, %v274
    %v281 = vsel %vm279, %v13, %v276
    %vm282 = vcmask 261120
    %283 = vst.msk [vmem:[#allocation2] sm:$0xff] %vm282, %v280
    %284 = vst.msk [vmem:[#allocation2 + $0x8] sm:$0xff] %vm282, %v281
    // Predicated region
    $region10: #{tpu_custom_call.1} parent=1 // pred_check
      _
    $region11: #{tpu_custom_call.1} parent=1 // pred_check_branch
      %286 = sbr.rel (0) target = $region13
    $region12: #{tpu_custom_call.1} parent=1 // pred_region
      %s288 = ssub.s32 256, 256
      %289 = vsyncadd [#allocation3], %s288
      %s290 = sshll.u32 [#allocation2], 4
      %s291 = int_to_ptr.vmem [resolvable:$true] %s290
      %296 = dma.vmem_to_hbm [thread:$0]  %s291, 256, %s2, [#allocation3], 128, 128, 8
    $region13: #{tpu_custom_call.1} parent=1 // pred_fallthru
      _
    // Predicated region
    $region14: #{tpu_custom_call.1} parent=1 // pred_check
      _
    $region15: #{tpu_custom_call.1} parent=1 // pred_check_branch
      %298 = sbr.rel (0) target = $region17
    $region16: #{tpu_custom_call.1} parent=1 // pred_region
      %299 = dma.done [#allocation3], 256
    $region17: #{tpu_custom_call.1} parent=1 // pred_fallthru
      _
    %300 = vsyncpa [#allocation3], 1

</llo_original>
